<compile_context>
chip_gen: v6e
topology: v6e:2x2x1
jax: 0.10.0
libtpu: 0.0.40
codegen_flags: <defaults>
</compile_context>

<pallas_src>
import functools
import math

import jax
import jax.numpy as jnp
import numpy as np
from jax import lax
from jax.experimental import pallas as pl
from jax.experimental.pallas import tpu as pltpu


def _round_up(a: int, b: int) -> int:
    return (a + b - 1) // b * b


def _cdiv(a: int, b: int) -> int:
    return -(-a // b)


# ------------------------------------------------------------------------------------------
# Phase 1: stream the F (=C*H*W) reduction.  Grid = (num_splits, steps):
#   axis 0 ("parallel")  -> independent spans of F (one per TensorCore on v7x megacore)
#   axis 1 ("arbitrary") -> tf-lane chunks of that span (double-buffered by BlockSpec)
# Per split we accumulate, directly into resident fp32 output blocks:
#   h_real += reals_chunk @ W1_chunk^T     (B , Hd)
#   h_fake += fakes_chunk @ W1_chunk^T     (B , Hd)
#   gram   += W1_chunk   @ W1_chunk^T      (Hd, Hd)   [only when should_reg]
# ------------------------------------------------------------------------------------------
def _stream_kernel(r_ref, f_ref, w1_ref, *out_refs, should_reg):
    if should_reg:
        hr_ref, hf_ref, gram_ref = out_refs
    else:
        hr_ref, hf_ref = out_refs
        gram_ref = None

    k = pl.program_id(1)

    @pl.when(k == 0)
    def _init():
        hr_ref[...] = jnp.zeros_like(hr_ref)
        hf_ref[...] = jnp.zeros_like(hf_ref)
        if should_reg:
            gram_ref[...] = jnp.zeros_like(gram_ref)

    nt = (((1,), (1,)), ((), ()))      # contract the lane (F) axis of both operands: A @ B^T
    wc = w1_ref[...]                   # (Hd, tf) bf16 chunk of W1
    hr_ref[0] += lax.dot_general(r_ref[...], wc, nt, preferred_element_type=jnp.float32)
    hf_ref[0] += lax.dot_general(f_ref[...], wc, nt, preferred_element_type=jnp.float32)
    if should_reg:
        gram_ref[0] += lax.dot_general(wc, wc, nt, preferred_element_type=jnp.float32)


# ------------------------------------------------------------------------------------------
# Phase 2: grid-free epilogue on the tiny fp32 partials.  Combines per-split partials,
# applies the D head, the logistic loss, the analytic R1 penalty (Gram quadratic form) and
# packs [loss, r1, d_real, d_fake] into one lane-dense (1, 4) store.
# ------------------------------------------------------------------------------------------
def _finalize_kernel(*refs, gamma, reg_interval, should_reg):
    if should_reg:
        hr_parts_ref, hf_parts_ref, gram_parts_ref, w2_ref, out_ref = refs
    else:
        hr_parts_ref, hf_parts_ref, w2_ref, out_ref = refs
        gram_parts_ref = None

    w2row = w2_ref[...]                                 # (1, Hd)
    h_real = jnp.sum(hr_parts_ref[...], axis=0)         # (B, Hd) pre-activations
    h_fake = jnp.sum(hf_parts_ref[...], axis=0)

    def score(h):
        a = jnp.where(h > 0, h, 0.2 * h)                # leaky_relu(0.2)
        return jnp.sum(a * w2row, axis=1, keepdims=True)    # (B, 1)

    real_score = score(h_real)
    fake_score = score(h_fake)

    def softplus(v):                                    # numerically stable softplus
        return jnp.maximum(v, 0.0) + jnp.log(1.0 + jnp.exp(-jnp.abs(v)))

    loss = jnp.mean(softplus(fake_score) + softplus(-real_score))

    if should_reg:
        gram = jnp.sum(gram_parts_ref[...], axis=0)     # (Hd, Hd) == W1 @ W1^T
        # d score_b / d x = W1^T (lrelu'(h_b) * w2)  =>  ||grad_b||^2 = gvec_b Gram gvec_b^T
        dlrelu = jnp.where(h_real > 0, 1.0, 0.2)        # (B, Hd)
        gvec = dlrelu * w2row                           # (B, Hd)
        t = jnp.dot(gvec, gram, preferred_element_type=jnp.float32)
        pen_mean = jnp.mean(jnp.sum(t * gvec, axis=1, keepdims=True))
        loss = loss + pen_mean * (gamma * 0.5) * reg_interval
    else:
        pen_mean = jnp.float32(0.0)

    real_mean = jnp.mean(real_score)
    fake_mean = jnp.mean(fake_score)

    lane = lax.broadcasted_iota(jnp.int32, (1, 4), 1)
    out_ref[...] = (jnp.where(lane == 0, loss, 0.0)
                    + jnp.where(lane == 1, pen_mean, 0.0)
                    + jnp.where(lane == 2, real_mean, 0.0)
                    + jnp.where(lane == 3, fake_mean, 0.0)).astype(out_ref.dtype)


def d_logistic_loss_r1(reals_nchw, z, params, *, label=None, gamma=10.0, reg_interval=16,
                       should_reg=True, tf=2048, num_splits=2):
    """Forward pass of D_LogisticLoss_R1 (count == 0 -> should_reg=True)."""
    del label
    B = reals_nchw.shape[0]
    F = math.prod(reals_nchw.shape[1:])

    # --- G forward (glue: synthetic generator = a single linear map) ---
    fakes_flat = z @ params["wg"]                        # (B, F) fp32
    _fake_w = z @ params["ww"]                           # produced and discarded, as in the module

    reals_flat = reals_nchw.reshape(B, F)

    w1t = params["w1t"]                                  # (Hd, F) pre-transposed layout
    hd = w1t.shape[0]
    w2row = params["w2"].reshape(1, -1).astype(jnp.float32)   # (1, Hd)

    # --- tiling: split F across `num_splits` parallel spans (v7x megacore; harmless on
    #     1-TC chips), tile each span with `tf` lanes, zero-pad F so the grid divides evenly.
    num_splits = max(1, int(num_splits))
    lanes = _round_up(F, 128)
    per_split = _round_up(_cdiv(lanes, num_splits), 128)
    tf = min(max(128, _round_up(tf, 128)), per_split)
    steps = _cdiv(per_split, tf)
    f_pad = num_splits * steps * tf

    def _stream_operand(x):                              # bf16 stream + zero-pad lane axis
        x = x.astype(jnp.bfloat16)
        if f_pad != F:
            x = jnp.pad(x, ((0, 0), (0, f_pad - F)))
        return x

    reals_s = _stream_operand(reals_flat)
    fakes_s = _stream_operand(fakes_flat)
    w1_s = _stream_operand(w1t)

    out_shapes = [jax.ShapeDtypeStruct((num_splits, B, hd), jnp.float32),
                  jax.ShapeDtypeStruct((num_splits, B, hd), jnp.float32)]
    out_specs = [pl.BlockSpec((1, B, hd), lambda c, k: (c, 0, 0)),
                 pl.BlockSpec((1, B, hd), lambda c, k: (c, 0, 0))]
    if should_reg:
        out_shapes.append(jax.ShapeDtypeStruct((num_splits, hd, hd), jnp.float32))
        out_specs.append(pl.BlockSpec((1, hd, hd), lambda c, k: (c, 0, 0)))

    chunk = lambda c, k: (0, c * steps + k)              # lane-block index for this (split, step)
    parts = pl.pallas_call(
        functools.partial(_stream_kernel, should_reg=should_reg),
        out_shape=out_shapes,
        grid=(num_splits, steps),
        in_specs=[pl.BlockSpec((B, tf), chunk),          # reals: stream F in bf16
                  pl.BlockSpec((B, tf), chunk),          # fakes: stream F in bf16 (no HBM concat)
                  pl.BlockSpec((hd, tf), chunk)],        # W1 (Hd, F layout): streams HBM once
        out_specs=out_specs,
        compiler_params=pltpu.CompilerParams(
            dimension_semantics=("parallel", "arbitrary")),
    )(reals_s, fakes_s, w1_s)

    out = pl.pallas_call(
        functools.partial(_finalize_kernel, gamma=float(gamma),
                          reg_interval=float(reg_interval), should_reg=should_reg),
        out_shape=jax.ShapeDtypeStruct((1, 4), jnp.float32),
    )(*parts, w2row)

    stats = dict(D_loss=out[0, 0], D_r1=out[0, 1], D_real=out[0, 2], D_fake=out[0, 3])
    return out[0, 0], stats


def _reference(reals_nchw, z, params, *, gamma, reg_interval, should_reg):
    """Pure-JAX reference (autodiff R1) on the same bf16-rounded streamed operands."""
    B = reals_nchw.shape[0]
    F = math.prod(reals_nchw.shape[1:])
    q = lambda x: x.astype(jnp.bfloat16).astype(jnp.float32)   # match the kernel's bf16 streaming
    reals_flat = q(reals_nchw.reshape(B, F))
    fakes_flat = q(z @ params["wg"])
    w1t = q(params["w1t"])
    w2row = params["w2"].reshape(1, -1).astype(jnp.float32)

    def d(xf):
        h = jnp.dot(xf, w1t.T, precision=jax.lax.Precision.HIGHEST)
        a = jnp.where(h > 0, h, 0.2 * h)
        return jnp.sum(a * w2row, axis=1, keepdims=True)

    rs, fs = d(reals_flat), d(fakes_flat)
    loss = jnp.mean(jax.nn.softplus(fs) + jax.nn.softplus(-rs))
    grad = jax.grad(lambda xf: d(xf).sum())(reals_flat)
    pen = jnp.mean(jnp.sum(grad ** 2, axis=1))
    if should_reg:
        loss = loss + pen * (gamma * 0.5) * reg_interval
    return loss, pen, jnp.mean(rs), jnp.mean(fs)


if __name__ == "__main__":
    B, C, H, W = 2, 4, 16, 16
    Z, HD = 8, 32
    F = C * H * W
    GAMMA, REG_INTERVAL = 10.0, 16

    key = jax.random.PRNGKey(0)
    k_real, k_z, k_wg, k_ww, k_w1, k_w2 = jax.random.split(key, 6)

    reals = jax.random.normal(k_real, (B, C, H, W), jnp.float32)
    z = jax.random.normal(k_z, (B, Z), jnp.float32)
    params = dict(
        wg=jax.random.normal(k_wg, (Z, F), jnp.float32) * 0.1,      # synthetic G
        ww=jax.random.normal(k_ww, (Z, 16), jnp.float32) * 0.1,     # synthetic w-latent head
        w1t=jax.random.normal(k_w1, (HD, F), jnp.float32) * 0.02,   # synthetic D layer 1, (Hd, F)
        w2=jax.random.normal(k_w2, (HD, 1), jnp.float32) * 0.1,     # synthetic D layer 2
    )

    # Regularized step (count == 0 -> should_reg=True), as in the module's first call.
    loss, stats = d_logistic_loss_r1(reals, z, params, gamma=GAMMA,
                                     reg_interval=REG_INTERVAL, should_reg=True)
    jax.block_until_ready(loss)

    ref_loss, ref_r1, ref_real, ref_fake = _reference(
        reals, z, params, gamma=GAMMA, reg_interval=REG_INTERVAL, should_reg=True)
    np.testing.assert_allclose(np.asarray(loss), np.asarray(ref_loss), rtol=2e-3, atol=2e-4)
    np.testing.assert_allclose(np.asarray(stats["D_r1"]), np.asarray(ref_r1), rtol=2e-3, atol=2e-4)
    np.testing.assert_allclose(np.asarray(stats["D_real"]), np.asarray(ref_real), rtol=2e-3, atol=2e-4)
    np.testing.assert_allclose(np.asarray(stats["D_fake"]), np.asarray(ref_fake), rtol=2e-3, atol=2e-4)

    # Non-regularized step (count != 0): no Gram output / contraction is even built.
    loss_nr, stats_nr = d_logistic_loss_r1(reals, z, params, gamma=GAMMA,
                                           reg_interval=REG_INTERVAL, should_reg=False)
    jax.block_until_ready(loss_nr)
    ref_loss_nr, _, _, _ = _reference(reals, z, params, gamma=GAMMA,
                                      reg_interval=REG_INTERVAL, should_reg=False)
    np.testing.assert_allclose(np.asarray(loss_nr), np.asarray(ref_loss_nr), rtol=2e-3, atol=2e-4)
    np.testing.assert_allclose(np.asarray(stats_nr["D_r1"]), 0.0, atol=1e-7)

    print("KERNEL_OK")
</pallas_src>

<mosaic_0001>
module attributes {stable_mosaic.version = 11 : i64} {
  func.func @_stream_kernel(%arg0: i32, %arg1: i32, %arg2: memref<2x512xbf16, #tpu.memory_space<vmem>>, %arg3: memref<2x512xbf16, #tpu.memory_space<vmem>>, %arg4: memref<32x512xbf16, #tpu.memory_space<vmem>>, %arg5: memref<1x2x32xf32, #tpu.memory_space<vmem>>, %arg6: memref<1x2x32xf32, #tpu.memory_space<vmem>>, %arg7: memref<1x32x32xf32, #tpu.memory_space<vmem>>) attributes {dimension_semantics = [#tpu.dimension_semantics<parallel>, #tpu.dimension_semantics<arbitrary>], iteration_bounds = array<i64: 2, 1>, scalar_prefetch = 0 : i64, scratch_operands = 0 : i64, tpu.core_type = #tpu.core_type<tc>, window_params = [{transform_indices = @transform_0, window_bounds = array<i64: 2, 512>}, {transform_indices = @transform_1, window_bounds = array<i64: 2, 512>}, {transform_indices = @transform_2, window_bounds = array<i64: 32, 512>}, {transform_indices = @transform_3, window_bounds = array<i64: 1, 2, 32>}, {transform_indices = @transform_4, window_bounds = array<i64: 1, 2, 32>}, {transform_indices = @transform_5, window_bounds = array<i64: 1, 32, 32>}]} {
    %c0_i32 = arith.constant 0 : i32
    %0 = arith.cmpi eq, %arg1, %c0_i32 : i32
    %1 = arith.extui %0 : i1 to i32
    %c0_i32_0 = arith.constant 0 : i32
    %2 = arith.cmpi ne, %1, %c0_i32_0 : i32
    scf.if %2 {
      %cst_26 = arith.constant 0.000000e+00 : f32
      %27 = vector.broadcast %cst_26 : f32 to vector<1x2x32xf32>
      %c0_27 = arith.constant 0 : index
      %c0_28 = arith.constant 0 : index
      %c0_29 = arith.constant 0 : index
      %28 = vector.load %arg5[%c0_27, %c0_28, %c0_29] : memref<1x2x32xf32, #tpu.memory_space<vmem>>, vector<1x2x32xf32>
      tpu.vector_store %arg5[%c0_27, %c0_28, %c0_29], %27 {strides = array<i32>} : memref<1x2x32xf32, #tpu.memory_space<vmem>>, vector<1x2x32xf32>,
      %cst_30 = arith.constant 0.000000e+00 : f32
      %29 = vector.broadcast %cst_30 : f32 to vector<1x2x32xf32>
      %c0_31 = arith.constant 0 : index
      %c0_32 = arith.constant 0 : index
      %c0_33 = arith.constant 0 : index
      %30 = vector.load %arg6[%c0_31, %c0_32, %c0_33] : memref<1x2x32xf32, #tpu.memory_space<vmem>>, vector<1x2x32xf32>
      tpu.vector_store %arg6[%c0_31, %c0_32, %c0_33], %29 {strides = array<i32>} : memref<1x2x32xf32, #tpu.memory_space<vmem>>, vector<1x2x32xf32>,
      %cst_34 = arith.constant 0.000000e+00 : f32
      %31 = vector.broadcast %cst_34 : f32 to vector<1x32x32xf32>
      %c0_35 = arith.constant 0 : index
      %c0_36 = arith.constant 0 : index
      %c0_37 = arith.constant 0 : index
      %32 = vector.load %arg7[%c0_35, %c0_36, %c0_37] : memref<1x32x32xf32, #tpu.memory_space<vmem>>, vector<1x32x32xf32>
      tpu.vector_store %arg7[%c0_35, %c0_36, %c0_37], %31 {strides = array<i32>} : memref<1x32x32xf32, #tpu.memory_space<vmem>>, vector<1x32x32xf32>,
    } else {
    }
    %c0 = arith.constant 0 : index
    %c0_1 = arith.constant 0 : index
    %3 = vector.load %arg4[%c0, %c0_1] : memref<32x512xbf16, #tpu.memory_space<vmem>>, vector<32x512xbf16>
    %c0_2 = arith.constant 0 : index
    %c0_3 = arith.constant 0 : index
    %c0_4 = arith.constant 0 : index
    %4 = vector.load %arg5[%c0_2, %c0_3, %c0_4] : memref<1x2x32xf32, #tpu.memory_space<vmem>>, vector<1x2x32xf32>
    %5 = vector.shape_cast %4 : vector<1x2x32xf32> to vector<2x32xf32>
    %c0_5 = arith.constant 0 : index
    %c0_6 = arith.constant 0 : index
    %6 = vector.load %arg2[%c0_5, %c0_6] : memref<2x512xbf16, #tpu.memory_space<vmem>>, vector<2x512xbf16>
    %cst = arith.constant dense<0.000000e+00> : vector<2x32xf32>
    %7 = tpu.matmul %6, %3, %cst {dimension_numbers = #tpu.dot_dimension_numbers<[1], [1], [0], [0], [0, 0, 1, 0], [], []>} : vector<2x512xbf16>, vector<32x512xbf16>, vector<2x32xf32> -> vector<2x32xf32>
    %8 = arith.addf %5, %7 : vector<2x32xf32>
    %c0_7 = arith.constant 0 : index
    %c0_8 = arith.constant 0 : index
    %c0_9 = arith.constant 0 : index
    %9 = vector.load %arg5[%c0_7, %c0_8, %c0_9] : memref<1x2x32xf32, #tpu.memory_space<vmem>>, vector<1x2x32xf32>
    %10 = vector.shape_cast %9 : vector<1x2x32xf32> to vector<2x32xf32>
    %11 = vector.shape_cast %8 : vector<2x32xf32> to vector<1x2x32xf32>
    tpu.vector_store %arg5[%c0_7, %c0_8, %c0_9], %11 {strides = array<i32>} : memref<1x2x32xf32, #tpu.memory_space<vmem>>, vector<1x2x32xf32>,
    %c0_10 = arith.constant 0 : index
    %c0_11 = arith.constant 0 : index
    %c0_12 = arith.constant 0 : index
    %12 = vector.load %arg6[%c0_10, %c0_11, %c0_12] : memref<1x2x32xf32, #tpu.memory_space<vmem>>, vector<1x2x32xf32>
    %13 = vector.shape_cast %12 : vector<1x2x32xf32> to vector<2x32xf32>
    %c0_13 = arith.constant 0 : index
    %c0_14 = arith.constant 0 : index
    %14 = vector.load %arg3[%c0_13, %c0_14] : memref<2x512xbf16, #tpu.memory_space<vmem>>, vector<2x512xbf16>
    %cst_15 = arith.constant dense<0.000000e+00> : vector<2x32xf32>
    %15 = tpu.matmul %14, %3, %cst_15 {dimension_numbers = #tpu.dot_dimension_numbers<[1], [1], [0], [0], [0, 0, 1, 0], [], []>} : vector<2x512xbf16>, vector<32x512xbf16>, vector<2x32xf32> -> vector<2x32xf32>
    %16 = arith.addf %13, %15 : vector<2x32xf32>
    %c0_16 = arith.constant 0 : index
    %c0_17 = arith.constant 0 : index
    %c0_18 = arith.constant 0 : index
    %17 = vector.load %arg6[%c0_16, %c0_17, %c0_18] : memref<1x2x32xf32, #tpu.memory_space<vmem>>, vector<1x2x32xf32>
    %18 = vector.shape_cast %17 : vector<1x2x32xf32> to vector<2x32xf32>
    %19 = vector.shape_cast %16 : vector<2x32xf32> to vector<1x2x32xf32>
    tpu.vector_store %arg6[%c0_16, %c0_17, %c0_18], %19 {strides = array<i32>} : memref<1x2x32xf32, #tpu.memory_space<vmem>>, vector<1x2x32xf32>,
    %c0_19 = arith.constant 0 : index
    %c0_20 = arith.constant 0 : index
    %c0_21 = arith.constant 0 : index
    %20 = vector.load %arg7[%c0_19, %c0_20, %c0_21] : memref<1x32x32xf32, #tpu.memory_space<vmem>>, vector<1x32x32xf32>
    %21 = vector.shape_cast %20 : vector<1x32x32xf32> to vector<32x32xf32>
    %cst_22 = arith.constant dense<0.000000e+00> : vector<32x32xf32>
    %22 = tpu.matmul %3, %3, %cst_22 {dimension_numbers = #tpu.dot_dimension_numbers<[1], [1], [0], [0], [0, 0, 1, 0], [], []>} : vector<32x512xbf16>, vector<32x512xbf16>, vector<32x32xf32> -> vector<32x32xf32>
    %23 = arith.addf %21, %22 : vector<32x32xf32>
    %c0_23 = arith.constant 0 : index
    %c0_24 = arith.constant 0 : index
    %c0_25 = arith.constant 0 : index
    %24 = vector.load %arg7[%c0_23, %c0_24, %c0_25] : memref<1x32x32xf32, #tpu.memory_space<vmem>>, vector<1x32x32xf32>
    %25 = vector.shape_cast %24 : vector<1x32x32xf32> to vector<32x32xf32>
    %26 = vector.shape_cast %23 : vector<32x32xf32> to vector<1x32x32xf32>
    tpu.vector_store %arg7[%c0_23, %c0_24, %c0_25], %26 {strides = array<i32>} : memref<1x32x32xf32, #tpu.memory_space<vmem>>, vector<1x32x32xf32>,
    return
  }
  func.func @transform_0(%arg0: i32, %arg1: i32) -> (i32, i32) {
    %c1_i32 = arith.constant 1 : i32
    %0 = arith.muli %arg0, %c1_i32 : i32
    %1 = arith.addi %0, %arg1 : i32
    %c0_i32 = arith.constant 0 : i32
    %c0_i32_0 = arith.constant 0 : i32
    return %c0_i32, %1 : i32, i32
  }
  func.func @transform_1(%arg0: i32, %arg1: i32) -> (i32, i32) {
    %c1_i32 = arith.constant 1 : i32
    %0 = arith.muli %arg0, %c1_i32 : i32
    %1 = arith.addi %0, %arg1 : i32
    %c0_i32 = arith.constant 0 : i32
    %c0_i32_0 = arith.constant 0 : i32
    return %c0_i32, %1 : i32, i32
  }
  func.func @transform_2(%arg0: i32, %arg1: i32) -> (i32, i32) {
    %c1_i32 = arith.constant 1 : i32
    %0 = arith.muli %arg0, %c1_i32 : i32
    %1 = arith.addi %0, %arg1 : i32
    %c0_i32 = arith.constant 0 : i32
    %c0_i32_0 = arith.constant 0 : i32
    return %c0_i32, %1 : i32, i32
  }
  func.func @transform_3(%arg0: i32, %arg1: i32) -> (i32, i32, i32) {
    %c0_i32 = arith.constant 0 : i32
    %c0_i32_0 = arith.constant 0 : i32
    %c0_i32_1 = arith.constant 0 : i32
    return %arg0, %c0_i32, %c0_i32_0 : i32, i32, i32
  }
  func.func @transform_4(%arg0: i32, %arg1: i32) -> (i32, i32, i32) {
    %c0_i32 = arith.constant 0 : i32
    %c0_i32_0 = arith.constant 0 : i32
    %c0_i32_1 = arith.constant 0 : i32
    return %arg0, %c0_i32, %c0_i32_0 : i32, i32, i32
  }
  func.func @transform_5(%arg0: i32, %arg1: i32) -> (i32, i32, i32) {
    %c0_i32 = arith.constant 0 : i32
    %c0_i32_0 = arith.constant 0 : i32
    %c0_i32_1 = arith.constant 0 : i32
    return %arg0, %c0_i32, %c0_i32_0 : i32, i32, i32
  }
}

</mosaic_0001>

<llo_original>
// kernel: tpu_custom_call.1
$region0: #{tpu_custom_call.1}
  #allocation0 [shape = 'u32[]', space=smem, size = 0x4, offset = 0x4, fixed_abs, tag = 'smem constant byte address 0x4 - core index']
  #allocation1 [shape = 'u32[144,128]{1,0:T(1,128)}', space=vmem, size = 0x12000, scoped, tag = 'internal scratch']
  %s0 = inlined_call_operand.hbm [shape: bf16[2,1024], index: 0, kind: input, shape index: {}]
  %s1 = inlined_call_operand.hbm [shape: bf16[2,1024], index: 1, kind: input, shape index: {}]
  %s2 = inlined_call_operand.hbm [shape: bf16[32,1024], index: 2, kind: input, shape index: {}]
  %s3 = inlined_call_operand.hbm [shape: f32[2,2,32], index: 3, kind: output, shape index: {0}]
  %s4 = inlined_call_operand.hbm [shape: f32[2,2,32], index: 4, kind: output, shape index: {1}]
  %s5 = inlined_call_operand.hbm [shape: f32[2,32,32], index: 5, kind: output, shape index: {2}]
  %6 = xla_tuple %s3, %s4, %s5
  %s7 = sld [smem:[#allocation0]]
  $region77: #{tpu_custom_call.1} parent=0
    _
  %s9 = ssub.s32 1, %s7
  %s10 = scalar_select 0, %s9, %s7
  $region1: #{tpu_custom_call.1} parent=0
    #allocation2 [shape = 'u8[4096]{0}', space=vmem, size = 0x1000, scoped, tag = 'input window, operand 0']
    #allocation3 [shape = 's32[2]{0}', space=sflag, size = 0x8, scoped, tag = 'scoped memory for tpu_custom_call.1']
    #allocation4 [shape = 's32[2]{0}', space=sflag, size = 0x8, scoped, tag = 'scoped memory for tpu_custom_call.1']
    #allocation5 [shape = 'u8[4096]{0}', space=vmem, size = 0x1000, scoped, tag = 'input window, operand 1']
    #allocation6 [shape = 's32[2]{0}', space=sflag, size = 0x8, scoped, tag = 'scoped memory for tpu_custom_call.1']
    #allocation7 [shape = 'u8[65536]{0}', space=vmem, size = 0x10000, scoped, tag = 'input window, operand 2']
    #allocation8 [shape = 'u8[2048]{0}', space=vmem, size = 0x800, scoped, tag = 'output window, operand 0']
    #allocation9 [shape = 'u8[2048]{0}', space=vmem, size = 0x800, scoped, tag = 'output window, operand 1']
    #allocation10 [shape = 's32[2]{0}', space=sflag, size = 0x8, scoped, tag = 'scoped memory for tpu_custom_call.1']
    #allocation11 [shape = 'u8[32768]{0}', space=vmem, size = 0x8000, scoped, tag = 'output window, operand 2']
    %11 = vsyncpa [#allocation3], 0
    %s12 = scalar_lea.sflag [#allocation3], 1
    %13 = vsyncpa %s12, 0
    %14 = vsyncpa [#allocation6], 0
    %s15 = scalar_lea.sflag [#allocation6], 1
    %16 = vsyncpa %s15, 0
    %17 = vsyncpa [#allocation4], 0
    %s18 = scalar_lea.sflag [#allocation4], 1
    %19 = vsyncpa %s18, 0
    %20 = vsyncpa [#allocation10], 0
    %s21 = scalar_lea.sflag [#allocation10], 1
    %22 = vsyncpa %s21, 0
    loop: start=0, step=1, limit=4
    $region2: #{tpu_custom_call.1} parent=1 // loop_pre_header
      _
    $region3: #{tpu_custom_call.1} parent=1 // loop_header
      %s24 = sphi 0, %s28
      %p25 = scmp.ge.s32.totalorder %s24, 4
      %s31 = sphi 0, %s43
      %s32 = sphi 0, %s39
      %s33 = sphi 0, %s31
      %s34 = sphi 0, %s32
      %s35 = sphi 0, %s33
      %s36 = sphi 0, %s34
      %s48 = sphi 0, %s50
      %s51 = sphi 0, %s48
      %s52 = sphi 0, %s51
      %s68 = sphi 0, %s52
      %s76 = sphi 0, %s78
      %s79 = sphi 0, %s76
      %s80 = sphi 0, %s79
      %s96 = sphi 0, %s80
      %s104 = sphi 0, %s106
      %s107 = sphi 0, %s104
      %s108 = sphi 0, %s107
      %s124 = sphi 0, %s108
      %s130 = sphi 0, %s132
      %s133 = sphi 0, %s130
      %s134 = sphi 0, %s133
      %s150 = sphi 0, %s134
      %s156 = sphi 0, %s158
      %s159 = sphi 0, %s156
      %s160 = sphi 0, %s159
      %s176 = sphi 0, %s160
      %s182 = sphi 0, %s184
      %s185 = sphi 0, %s182
      %s186 = sphi 0, %s185
      %s202 = sphi 0, %s186
    $region4: #{tpu_custom_call.1} parent=1 // loop_header_branch
      %27 = sbr.rel (%p25) target = $region8
    $region5: #{tpu_custom_call.1} parent=1 // loop_body
      %s29 = ssub.s32 %s24, 1
      %s30 = ssub.s32 %s24, 2
      %s37 = sadd.s32 1, %s32
      %p38 = scmp.ge.s32.totalorder %s37, 1
      %s39 = scalar_select %p38, 0, %s37
      %s40 = sadd.s32 1, %s31
      %s41 = scalar_select %p38, %s40, %s31
      %p42 = scmp.ge.s32.totalorder %s41, 2
      %s43 = scalar_select %p42, 0, %s41
      %s44 = sadd.s32 %s31, %s32
      %s45 = sadd.s32 %s43, %s39
      %s46 = ssub.s32 %s44, %s45
      %p47 = scmp.eq.s32.totalorder %s46, 0
      %s49 = sadd.s32 %s48, 1
      %s50 = scalar_select %p47, %s48, %s49
      %p53 = pneg %p47
      %p54 = scmp.eq.s32.totalorder %s24, 1
      %p55 = por %p53, %p54
      %p56 = scmp.ne.s32.totalorder %s48, %s51
      %p57 = scmp.eq.s32.totalorder %s24, 0
      %p58 = por %p56, %p57
      %p59 = scmp.ne.s32.totalorder %s48, %s51
      %p60 = scmp.eq.s32.totalorder %s29, 1
      %p61 = por %p59, %p60
      %p62 = scmp.ne.s32.totalorder %s51, %s52
      %p63 = scmp.eq.s32.totalorder %s29, 0
      %p64 = por %p62, %p63
      %p65 = scmp.ne.s32.totalorder %s51, %s52
      %p66 = scmp.eq.s32.totalorder %s30, 1
      %p67 = por %p65, %p66
      %p69 = scmp.ne.s32.totalorder %s52, %s68
      %p70 = scmp.eq.s32.totalorder %s30, 0
      %p71 = por %p69, %p70
      %s72 = sadd.s32 %s31, %s32
      %s73 = sadd.s32 %s43, %s39
      %s74 = ssub.s32 %s72, %s73
      %p75 = scmp.eq.s32.totalorder %s74, 0
      %s77 = sadd.s32 %s76, 1
      %s78 = scalar_select %p75, %s76, %s77
      %p81 = pneg %p75
      %p82 = scmp.eq.s32.totalorder %s24, 1
      %p83 = por %p81, %p82
      %p84 = scmp.ne.s32.totalorder %s76, %s79
      %p85 = scmp.eq.s32.totalorder %s24, 0
      %p86 = por %p84, %p85
      %p87 = scmp.ne.s32.totalorder %s76, %s79
      %p88 = scmp.eq.s32.totalorder %s29, 1
      %p89 = por %p87, %p88
      %p90 = scmp.ne.s32.totalorder %s79, %s80
      %p91 = scmp.eq.s32.totalorder %s29, 0
      %p92 = por %p90, %p91
      %p93 = scmp.ne.s32.totalorder %s79, %s80
      %p94 = scmp.eq.s32.totalorder %s30, 1
      %p95 = por %p93, %p94
      %p97 = scmp.ne.s32.totalorder %s80, %s96
      %p98 = scmp.eq.s32.totalorder %s30, 0
      %p99 = por %p97, %p98
      %s100 = sadd.s32 %s31, %s32
      %s101 = sadd.s32 %s43, %s39
      %s102 = ssub.s32 %s100, %s101
      %p103 = scmp.eq.s32.totalorder %s102, 0
      %s105 = sadd.s32 %s104, 1
      %s106 = scalar_select %p103, %s104, %s105
      %p109 = pneg %p103
      %p110 = scmp.eq.s32.totalorder %s24, 1
      %p111 = por %p109, %p110
      %p112 = scmp.ne.s32.totalorder %s104, %s107
      %p113 = scmp.eq.s32.totalorder %s24, 0
      %p114 = por %p112, %p113
      %p115 = scmp.ne.s32.totalorder %s104, %s107
      %p116 = scmp.eq.s32.totalorder %s29, 1
      %p117 = por %p115, %p116
      %p118 = scmp.ne.s32.totalorder %s107, %s108
      %p119 = scmp.eq.s32.totalorder %s29, 0
      %p120 = por %p118, %p119
      %p121 = scmp.ne.s32.totalorder %s107, %s108
      %p122 = scmp.eq.s32.totalorder %s30, 1
      %p123 = por %p121, %p122
      %p125 = scmp.ne.s32.totalorder %s108, %s124
      %p126 = scmp.eq.s32.totalorder %s30, 0
      %p127 = por %p125, %p126
      %s128 = ssub.s32 %s31, %s43
      %p129 = scmp.eq.s32.totalorder %s128, 0
      %s131 = sadd.s32 %s130, 1
      %s132 = scalar_select %p129, %s130, %s131
      %p135 = pneg %p129
      %p136 = scmp.eq.s32.totalorder %s24, 1
      %p137 = por %p135, %p136
      %p138 = scmp.ne.s32.totalorder %s130, %s133
      %p139 = scmp.eq.s32.totalorder %s24, 0
      %p140 = por %p138, %p139
      %p141 = scmp.ne.s32.totalorder %s130, %s133
      %p142 = scmp.eq.s32.totalorder %s29, 1
      %p143 = por %p141, %p142
      %p144 = scmp.ne.s32.totalorder %s133, %s134
      %p145 = scmp.eq.s32.totalorder %s29, 0
      %p146 = por %p144, %p145
      %p147 = scmp.ne.s32.totalorder %s133, %s134
      %p148 = scmp.eq.s32.totalorder %s30, 1
      %p149 = por %p147, %p148
      %p151 = scmp.ne.s32.totalorder %s134, %s150
      %p152 = scmp.eq.s32.totalorder %s30, 0
      %p153 = por %p151, %p152
      %s154 = ssub.s32 %s31, %s43
      %p155 = scmp.eq.s32.totalorder %s154, 0
      %s157 = sadd.s32 %s156, 1
      %s158 = scalar_select %p155, %s156, %s157
      %p161 = pneg %p155
      %p162 = scmp.eq.s32.totalorder %s24, 1
      %p163 = por %p161, %p162
      %p164 = scmp.ne.s32.totalorder %s156, %s159
      %p165 = scmp.eq.s32.totalorder %s24, 0
      %p166 = por %p164, %p165
      %p167 = scmp.ne.s32.totalorder %s156, %s159
      %p168 = scmp.eq.s32.totalorder %s29, 1
      %p169 = por %p167, %p168
      %p170 = scmp.ne.s32.totalorder %s159, %s160
      %p171 = scmp.eq.s32.totalorder %s29, 0
      %p172 = por %p170, %p171
      %p173 = scmp.ne.s32.totalorder %s159, %s160
      %p174 = scmp.eq.s32.totalorder %s30, 1
      %p175 = por %p173, %p174
      %p177 = scmp.ne.s32.totalorder %s160, %s176
      %p178 = scmp.eq.s32.totalorder %s30, 0
      %p179 = por %p177, %p178
      %s180 = ssub.s32 %s31, %s43
      %p181 = scmp.eq.s32.totalorder %s180, 0
      %s183 = sadd.s32 %s182, 1
      %s184 = scalar_select %p181, %s182, %s183
      %p187 = pneg %p181
      %p188 = scmp.eq.s32.totalorder %s24, 1
      %p189 = por %p187, %p188
      %p190 = scmp.ne.s32.totalorder %s182, %s185
      %p191 = scmp.eq.s32.totalorder %s24, 0
      %p192 = por %p190, %p191
      %p193 = scmp.ne.s32.totalorder %s182, %s185
      %p194 = scmp.eq.s32.totalorder %s29, 1
      %p195 = por %p193, %p194
      %p196 = scmp.ne.s32.totalorder %s185, %s186
      %p197 = scmp.eq.s32.totalorder %s29, 0
      %p198 = por %p196, %p197
      %p199 = scmp.ne.s32.totalorder %s185, %s186
      %p200 = scmp.eq.s32.totalorder %s30, 1
      %p201 = por %p199, %p200
      %p203 = scmp.ne.s32.totalorder %s186, %s202
      %p204 = scmp.eq.s32.totalorder %s30, 0
      %p205 = por %p203, %p204
      %p206 = scmp.le.s32.totalorder 1, %s24
      %p207 = scmp.lt.s32.totalorder %s24, 3
      %p208 = pnand %p206, %p207
      %p209 = pneg %p208
      // Predicated region
      $region9: #{tpu_custom_call.1} parent=5 // pred_check
        _
      $region10: #{tpu_custom_call.1} parent=5 // pred_check_branch
        %211 = sbr.rel (%p208) target = $region12
      $region11: #{tpu_custom_call.1} parent=5 // pred_region
        %s212 = ssub.s32 %s24, 1
      $region12: #{tpu_custom_call.1} parent=5 // pred_fallthru
        _
      %p213 = scmp.lt.s32.totalorder %s24, 2
      // Predicated region
      $region13: #{tpu_custom_call.1} parent=5 // pred_check
        %p214 = pneg %p213
      $region14: #{tpu_custom_call.1} parent=5 // pred_check_branch
        %216 = sbr.rel (%p214) target = $region16
      $region15: #{tpu_custom_call.1} parent=5 // pred_region
        // Predicated region
        $region17: #{tpu_custom_call.1} parent=15 // pred_check
          %p217 = pneg %p58
        $region18: #{tpu_custom_call.1} parent=15 // pred_check_branch
          %219 = sbr.rel (%p217) target = $region20
        $region19: #{tpu_custom_call.1} parent=15 // pred_region
          %s220 = sand.u32 %s48, 1
          %s221 = scalar_lea.sflag [#allocation3], %s220
          %s222 = sand.u32 %s48, 1
          %s223 = smul.addr %s222, 4
          %s224 = scalar_lea.vmem [#allocation2], %s223
          %s225 = sadd.s32 %s31, %s32
          %s226 = smul.u32 4, %s225
          %s228 = ssub.s32 64, 64
          %229 = vsyncadd %s221, %s228
          %s230 = smul.addr %s226, 16
          %s231 = scalar_lea.hbm %s0, %s230
          %s233 = sshll.u32 %s224, 4
          %s234 = int_to_ptr.vmem [resolvable:$true] %s233
          %236 = dma.hbm_to_vmem [thread:$0]  %s231, 64, %s234, %s221
        $region20: #{tpu_custom_call.1} parent=15 // pred_fallthru
          _
        // Predicated region
        $region21: #{tpu_custom_call.1} parent=15 // pred_check
          %p237 = pneg %p86
        $region22: #{tpu_custom_call.1} parent=15 // pred_check_branch
          %239 = sbr.rel (%p237) target = $region24
        $region23: #{tpu_custom_call.1} parent=15 // pred_region
          %s240 = sand.u32 %s24, 1
          %s241 = scalar_lea.sflag [#allocation6], %s240
          %s242 = sand.u32 %s76, 1
          %s243 = smul.addr %s242, 4
          %s244 = scalar_lea.vmem [#allocation5], %s243
          %s245 = sadd.s32 %s31, %s32
          %s246 = smul.u32 4, %s245
          %s248 = ssub.s32 64, 64
          %249 = vsyncadd %s241, %s248
          %s250 = smul.addr %s246, 16
          %s251 = scalar_lea.hbm %s1, %s250
          %s253 = sshll.u32 %s244, 4
          %s254 = int_to_ptr.vmem [resolvable:$true] %s253
          %256 = dma.hbm_to_vmem [thread:$0]  %s251, 64, %s254, %s241
        $region24: #{tpu_custom_call.1} parent=15 // pred_fallthru
          _
        // Predicated region
        $region25: #{tpu_custom_call.1} parent=15 // pred_check
          %p257 = pneg %p114
        $region26: #{tpu_custom_call.1} parent=15 // pred_check_branch
          %259 = sbr.rel (%p257) target = $region28
        $region27: #{tpu_custom_call.1} parent=15 // pred_region
          %s260 = sand.u32 %s24, 1
          %s261 = scalar_lea.sflag [#allocation6], %s260
          %s262 = sand.u32 %s104, 1
          %s263 = smul.addr %s262, 64
          %s264 = scalar_lea.vmem [#allocation7], %s263
          %s265 = sadd.s32 %s31, %s32
          %s266 = smul.u32 4, %s265
          %s268 = ssub.s32 1024, 1024
          %269 = vsyncadd %s261, %s268
          %s270 = smul.addr %s266, 64
          %s271 = scalar_lea.hbm %s2, %s270
          %s272 = sshll.u32 %s264, 4
          %s273 = int_to_ptr.vmem [resolvable:$true] %s272
          %278 = dma.hbm_to_vmem [thread:$0]  %s271, 1024, %s273, %s261, 512, 256, 16
        $region28: #{tpu_custom_call.1} parent=15 // pred_fallthru
          _
      $region16: #{tpu_custom_call.1} parent=5 // pred_fallthru
        _
      %p279 = scmp.le.s32.totalorder 1, %s24
      %p280 = scmp.lt.s32.totalorder %s24, 3
      %p281 = pnand %p279, %p280
      %p282 = pneg %p281
      // Predicated region
      $region29: #{tpu_custom_call.1} parent=5 // pred_check
        _
      $region30: #{tpu_custom_call.1} parent=5 // pred_check_branch
        %284 = sbr.rel (%p281) target = $region32
      $region31: #{tpu_custom_call.1} parent=5 // pred_region
        %s285 = ssub.s32 %s24, 1
        %s286 = sand.u32 %s51, 1
        %s287 = scalar_lea.sflag [#allocation3], %s286
        %s288 = sand.u32 %s51, 1
        %s289 = smul.addr %s288, 4
        %s290 = scalar_lea.vmem [#allocation2], %s289
        // Predicated region
        $region33: #{tpu_custom_call.1} parent=31 // pred_check
          %p291 = pneg %p64
        $region34: #{tpu_custom_call.1} parent=31 // pred_check_branch
          %293 = sbr.rel (%p291) target = $region36
        $region35: #{tpu_custom_call.1} parent=31 // pred_region
          %294 = dma.done %s287, 64
        $region36: #{tpu_custom_call.1} parent=31 // pred_fallthru
          _
        %s295 = sand.u32 %s29, 1
        %s296 = scalar_lea.sflag [#allocation6], %s295
        %s297 = sand.u32 %s79, 1
        %s298 = smul.addr %s297, 4
        %s299 = scalar_lea.vmem [#allocation5], %s298
        // Predicated region
        $region37: #{tpu_custom_call.1} parent=31 // pred_check
          %p300 = pneg %p92
        $region38: #{tpu_custom_call.1} parent=31 // pred_check_branch
          %302 = sbr.rel (%p300) target = $region40
        $region39: #{tpu_custom_call.1} parent=31 // pred_region
          %303 = dma.done %s296, 64
        $region40: #{tpu_custom_call.1} parent=31 // pred_fallthru
          _
        %s304 = sand.u32 %s29, 1
        %s305 = scalar_lea.sflag [#allocation6], %s304
        %s306 = sand.u32 %s107, 1
        %s307 = smul.addr %s306, 64
        %s308 = scalar_lea.vmem [#allocation7], %s307
        // Predicated region
        $region41: #{tpu_custom_call.1} parent=31 // pred_check
          %p309 = pneg %p120
        $region42: #{tpu_custom_call.1} parent=31 // pred_check_branch
          %311 = sbr.rel (%p309) target = $region44
        $region43: #{tpu_custom_call.1} parent=31 // pred_region
          %312 = dma.done %s305, 1024
        $region44: #{tpu_custom_call.1} parent=31 // pred_fallthru
          _
        %s313 = sand.u32 %s51, 1
        %s314 = scalar_lea.sflag [#allocation3], %s313
        %s315 = sand.u32 %s51, 1
        %s316 = smul.addr %s315, 4
        %s317 = scalar_lea.vmem [#allocation2], %s316
        %p318 = pneg %p64
        %p319 = pneg %p61
        %s320 = sand.u32 %s29, 1
        %s321 = scalar_lea.sflag [#allocation6], %s320
        %s322 = sand.u32 %s79, 1
        %s323 = smul.addr %s322, 4
        %s324 = scalar_lea.vmem [#allocation5], %s323
        %p325 = pneg %p92
        %p326 = pneg %p89
        %s327 = sand.u32 %s29, 1
        %s328 = scalar_lea.sflag [#allocation6], %s327
        %s329 = sand.u32 %s107, 1
        %s330 = smul.addr %s329, 64
        %s331 = scalar_lea.vmem [#allocation7], %s330
        %p332 = pneg %p120
        %p333 = pneg %p117
        %p334 = pneg %p146
        %p335 = pneg %p143
        %s336 = sand.u32 %s133, 1
        %s337 = scalar_lea.sflag [#allocation4], %s336
        %s338 = sand.u32 %s133, 1
        %s339 = smul.addr %s338, 2
        %s340 = scalar_lea.vmem [#allocation8], %s339
        %p341 = pneg %p172
        %p342 = pneg %p169
        %s343 = sand.u32 %s29, 1
        %s344 = scalar_lea.sflag [#allocation10], %s343
        %s345 = sand.u32 %s159, 1
        %s346 = smul.addr %s345, 2
        %s347 = scalar_lea.vmem [#allocation9], %s346
        %p348 = pneg %p198
        %p349 = pneg %p195
        %s350 = sand.u32 %s29, 1
        %s351 = scalar_lea.sflag [#allocation10], %s350
        %s352 = sand.u32 %s185, 1
        %s353 = smul.addr %s352, 32
        %s354 = scalar_lea.vmem [#allocation11], %s353
        %s355 = sadd.s32 %s33, %s34
        %s356 = smul.u32 4, %s355
        %s357 = sadd.s32 %s33, %s34
        %s358 = smul.u32 4, %s357
        %s359 = sadd.s32 %s33, %s34
        %s360 = smul.u32 4, %s359
        %p362 = scmp.eq.s32.totalorder %s34, 0
        // Predicated region
        $region45: #{tpu_custom_call.1} parent=31 // pred_check
          %p363 = pneg %p362
        $region46: #{tpu_custom_call.1} parent=31 // pred_check_branch
          %365 = sbr.rel (%p363) target = $region48
        $region47: #{tpu_custom_call.1} parent=31 // pred_region
          %vm366 = vcmask 254976
          %367 = vst.msk [vmem:[%s340] sm:$0x3] %vm366, 0.0
          %368 = vst.msk [vmem:[%s347] sm:$0x3] %vm366, 0.0
          %vm369 = vcmask 261120
          %370 = vst.msk [vmem:[%s354] sm:$0xff] %vm369, 0.0
          %371 = vst.msk [vmem:[%s354 + $0x8] sm:$0xff] %vm369, 0.0
          %372 = vst.msk [vmem:[%s354 + $0x10] sm:$0xff] %vm369, 0.0
          %373 = vst.msk [vmem:[%s354 + $0x18] sm:$0xff] %vm369, 0.0
        $region48: #{tpu_custom_call.1} parent=31 // pred_fallthru
          _
        %v374 = vld [vmem:[%s308] sm:$0xff]
        %v375 = vld [vmem:[%s308 + $0x8] sm:$0xff]
        %v376 = vld [vmem:[%s308 + $0x10] sm:$0xff]
        %v377 = vld [vmem:[%s308 + $0x18] sm:$0xff]
        %v378 = vld [vmem:[%s308 + $0x20] sm:$0xff]
        %v379 = vld [vmem:[%s308 + $0x28] sm:$0xff]
        %v380 = vld [vmem:[%s308 + $0x30] sm:$0xff]
        %v381 = vld [vmem:[%s308 + $0x38] sm:$0xff]
        %v382 = vld [vmem:[%s340] sm:$0x3]
        %v383 = vld [vmem:[%s290] sm:$0xf]
        %v386 = vunpack.c.l.s4 1966171168
        %v387 = vunpack.c.0.s8 %v386
        %v388 = vlaneseq
        %v389 = vshrl.u32 %v388, 7
        %v390 = vsub.s32 %v387, %v389
        %v391 = vrot.slane %v383, %v390
        %v392 = vcombine.high %v391, %v391
        %v394 = vunpack.c.l.s4 1966171168
        %v395 = vunpack.c.0.s8 %v394
        %v396 = vlaneseq
        %v397 = vshrl.u32 %v396, 7
        %v398 = vsub.s32 %v395, %v397
        %v399 = vrot.slane %v391, %v398
        %v401 = vunpack.c.l.s4 1966171168
        %v402 = vunpack.c.0.s8 %v401
        %v403 = vlaneseq
        %v404 = vshrl.u32 %v403, 7
        %v405 = vsub.s32 %v402, %v404
        %v406 = vrot.slane %v392, %v405
        %v407 = vcombine.high %v399, %v399
        %v408 = vcombine.high %v406, %v406
        %v421 = vunpack.c.l.b16 %v374
        %v422 = vunpack.c.h.b16 %v374
        %v423 = vunpack.c.l.b16 %v375
        %v424 = vunpack.c.h.b16 %v375
        %v425 = vunpack.c.l.b16 %v376
        %v426 = vunpack.c.h.b16 %v376
        %v427 = vunpack.c.l.b16 %v377
        %v428 = vunpack.c.h.b16 %v377
        %v429 = vunpack.c.l.b16 %v378
        %v430 = vunpack.c.h.b16 %v378
        %v431 = vunpack.c.l.b16 %v379
        %v432 = vunpack.c.h.b16 %v379
        %v433 = vunpack.c.l.b16 %v380
        %v434 = vunpack.c.h.b16 %v380
        %v435 = vunpack.c.l.b16 %v381
        %v436 = vunpack.c.h.b16 %v381
        %v437 = vpack.c.b16 %v425, %v421
        %v438 = vpack.c.b16 %v426, %v422
        %v439 = vpack.c.b16 %v427, %v423
        %v440 = vpack.c.b16 %v428, %v424
        %v441 = vpack.c.b16 %v433, %v429
        %v442 = vpack.c.b16 %v434, %v430
        %v443 = vpack.c.b16 %v435, %v431
        %v444 = vpack.c.b16 %v436, %v432
        %453 = vmatprep.subr.bf16.mxu0 0
        %454 = vmatpush1.bf16.xpose.msra.mxu0 0
        %455 = vmatprep.subr.bf16.mxu0 0
        %456 = vmatpush1.bf16.xpose.msra.mxu0 0
        %457 = vmatprep.subr.bf16.mxu0 0
        %458 = vmatpush1.bf16.xpose.msra.mxu0 0
        %459 = vmatprep.subr.bf16.mxu0 0
        %460 = vmatpush1.bf16.xpose.msra.mxu0 0
        %461 = vmatprep.subr.bf16.mxu0 0
        %462 = vmatpush1.bf16.xpose.msra.mxu0 0
        %463 = vmatprep.subr.bf16.mxu0 0
        %464 = vmatpush1.bf16.xpose.msra.mxu0 0
        %465 = vmatprep.subr.bf16.mxu0 %v442
        %466 = vmatpush1.bf16.xpose.msra.mxu0 %v441
        %467 = vmatprep.subr.bf16.mxu0 %v438
        %468 = vmatpush1.bf16.xpose.msra.mxu0 %v437
        %469 = vmatprep.subr.bf16.mxu0 0
        %470 = vmatpush2.bf16.xpose.msra.mxu0 0
        %471 = vmatprep.subr.bf16.mxu0 0
        %472 = vmatpush2.bf16.xpose.msra.mxu0 0
        %473 = vmatprep.subr.bf16.mxu0 0
        %474 = vmatpush2.bf16.xpose.msra.mxu0 0
        %475 = vmatprep.subr.bf16.mxu0 0
        %476 = vmatpush2.bf16.xpose.msra.mxu0 0
        %477 = vmatprep.subr.bf16.mxu0 0
        %478 = vmatpush2.bf16.xpose.msra.mxu0 0
        %479 = vmatprep.subr.bf16.mxu0 0
        %480 = vmatpush2.bf16.xpose.msra.mxu0 0
        %481 = vmatprep.subr.bf16.mxu0 0
        %482 = vmatpush2.bf16.xpose.msra.mxu0 0
        %483 = vmatprep.subr.bf16.mxu0 0
        %484 = vmatpush2.bf16.xpose.msra.mxu0 0
        %485 = vmatprep.mubr.bf16.mxu0 %v406
        %486 = vmatmul.mubr.bf16.gmra.mxu0 %v399
        %v487 = vpop.f32.mrf.mxu0
        %v488 = vadd.f32 0.0, %v487
        %v489 = vpop.f32.mrf.mxu0
        %v490 = vpop.f32.mrf.mxu0
        %v491 = vpop.f32.mrf.mxu0
        %492 = vdwg.mxu0
        %493 = vmatprep.subr.bf16.mxu0 0
        %494 = vmatpush1.bf16.xpose.msra.mxu0 0
        %495 = vmatprep.subr.bf16.mxu0 0
        %496 = vmatpush1.bf16.xpose.msra.mxu0 0
        %497 = vmatprep.subr.bf16.mxu0 0
        %498 = vmatpush1.bf16.xpose.msra.mxu0 0
        %499 = vmatprep.subr.bf16.mxu0 0
        %500 = vmatpush1.bf16.xpose.msra.mxu0 0
        %501 = vmatprep.subr.bf16.mxu0 0
        %502 = vmatpush1.bf16.xpose.msra.mxu0 0
        %503 = vmatprep.subr.bf16.mxu0 0
        %504 = vmatpush1.bf16.xpose.msra.mxu0 0
        %505 = vmatprep.subr.bf16.mxu0 %v444
        %506 = vmatpush1.bf16.xpose.msra.mxu0 %v443
        %507 = vmatprep.subr.bf16.mxu0 %v440
        %508 = vmatpush1.bf16.xpose.msra.mxu0 %v439
        %509 = vmatprep.subr.bf16.mxu0 0
        %510 = vmatpush2.bf16.xpose.msra.mxu0 0
        %511 = vmatprep.subr.bf16.mxu0 0
        %512 = vmatpush2.bf16.xpose.msra.mxu0 0
        %513 = vmatprep.subr.bf16.mxu0 0
        %514 = vmatpush2.bf16.xpose.msra.mxu0 0
        %515 = vmatprep.subr.bf16.mxu0 0
        %516 = vmatpush2.bf16.xpose.msra.mxu0 0
        %517 = vmatprep.subr.bf16.mxu0 0
        %518 = vmatpush2.bf16.xpose.msra.mxu0 0
        %519 = vmatprep.subr.bf16.mxu0 0
        %520 = vmatpush2.bf16.xpose.msra.mxu0 0
        %521 = vmatprep.subr.bf16.mxu0 0
        %522 = vmatpush2.bf16.xpose.msra.mxu0 0
        %523 = vmatprep.subr.bf16.mxu0 0
        %524 = vmatpush2.bf16.xpose.msra.mxu0 0
        %525 = vmatprep.mubr.bf16.mxu0 %v408
        %526 = vmatmul.mubr.bf16.gmra.mxu0 %v407
        %v527 = vpop.f32.mrf.mxu0
        %v528 = vadd.f32 %v488, %v527
        %v529 = vpop.f32.mrf.mxu0
        %v530 = vpop.f32.mrf.mxu0
        %v531 = vpop.f32.mrf.mxu0
        %532 = vdwg.mxu0
        %v533 = vadd.f32 %v382, %v528
        %vm534 = vcmask 254976
        %535 = vst.msk [vmem:[%s340] sm:$0x3] %vm534, %v533
        %v536 = vld [vmem:[%s347] sm:$0x3]
        %v537 = vld [vmem:[%s299] sm:$0xf]
        %v540 = vunpack.c.l.s4 1966171168
        %v541 = vunpack.c.0.s8 %v540
        %v542 = vlaneseq
        %v543 = vshrl.u32 %v542, 7
        %v544 = vsub.s32 %v541, %v543
        %v545 = vrot.slane %v537, %v544
        %v546 = vcombine.high %v545, %v545
        %v548 = vunpack.c.l.s4 1966171168
        %v549 = vunpack.c.0.s8 %v548
        %v550 = vlaneseq
        %v551 = vshrl.u32 %v550, 7
        %v552 = vsub.s32 %v549, %v551
        %v553 = vrot.slane %v545, %v552
        %v555 = vunpack.c.l.s4 1966171168
        %v556 = vunpack.c.0.s8 %v555
        %v557 = vlaneseq
        %v558 = vshrl.u32 %v557, 7
        %v559 = vsub.s32 %v556, %v558
        %v560 = vrot.slane %v546, %v559
        %v561 = vcombine.high %v553, %v553
        %v562 = vcombine.high %v560, %v560
        %567 = vmatprep.subr.bf16.mxu0 0
        %568 = vmatpush1.bf16.xpose.msra.mxu0 0
        %569 = vmatprep.subr.bf16.mxu0 0
        %570 = vmatpush1.bf16.xpose.msra.mxu0 0
        %571 = vmatprep.subr.bf16.mxu0 0
        %572 = vmatpush1.bf16.xpose.msra.mxu0 0
        %573 = vmatprep.subr.bf16.mxu0 0
        %574 = vmatpush1.bf16.xpose.msra.mxu0 0
        %575 = vmatprep.subr.bf16.mxu0 0
        %576 = vmatpush1.bf16.xpose.msra.mxu0 0
        %577 = vmatprep.subr.bf16.mxu0 0
        %578 = vmatpush1.bf16.xpose.msra.mxu0 0
        %579 = vmatprep.subr.bf16.mxu0 %v442
        %580 = vmatpush1.bf16.xpose.msra.mxu0 %v441
        %581 = vmatprep.subr.bf16.mxu0 %v438
        %582 = vmatpush1.bf16.xpose.msra.mxu0 %v437
        %583 = vmatprep.subr.bf16.mxu0 0
        %584 = vmatpush2.bf16.xpose.msra.mxu0 0
        %585 = vmatprep.subr.bf16.mxu0 0
        %586 = vmatpush2.bf16.xpose.msra.mxu0 0
        %587 = vmatprep.subr.bf16.mxu0 0
        %588 = vmatpush2.bf16.xpose.msra.mxu0 0
        %589 = vmatprep.subr.bf16.mxu0 0
        %590 = vmatpush2.bf16.xpose.msra.mxu0 0
        %591 = vmatprep.subr.bf16.mxu0 0
        %592 = vmatpush2.bf16.xpose.msra.mxu0 0
        %593 = vmatprep.subr.bf16.mxu0 0
        %594 = vmatpush2.bf16.xpose.msra.mxu0 0
        %595 = vmatprep.subr.bf16.mxu0 0
        %596 = vmatpush2.bf16.xpose.msra.mxu0 0
        %597 = vmatprep.subr.bf16.mxu0 0
        %598 = vmatpush2.bf16.xpose.msra.mxu0 0
        %599 = vmatprep.mubr.bf16.mxu0 %v560
        %600 = vmatmul.mubr.bf16.gmra.mxu0 %v553
        %v601 = vpop.f32.mrf.mxu0
        %v602 = vadd.f32 0.0, %v601
        %v603 = vpop.f32.mrf.mxu0
        %v604 = vpop.f32.mrf.mxu0
        %v605 = vpop.f32.mrf.mxu0
        %606 = vdwg.mxu0
        %607 = vmatprep.subr.bf16.mxu0 0
        %608 = vmatpush1.bf16.xpose.msra.mxu0 0
        %609 = vmatprep.subr.bf16.mxu0 0
        %610 = vmatpush1.bf16.xpose.msra.mxu0 0
        %611 = vmatprep.subr.bf16.mxu0 0
        %612 = vmatpush1.bf16.xpose.msra.mxu0 0
        %613 = vmatprep.subr.bf16.mxu0 0
        %614 = vmatpush1.bf16.xpose.msra.mxu0 0
        %615 = vmatprep.subr.bf16.mxu0 0
        %616 = vmatpush1.bf16.xpose.msra.mxu0 0
        %617 = vmatprep.subr.bf16.mxu0 0
        %618 = vmatpush1.bf16.xpose.msra.mxu0 0
        %619 = vmatprep.subr.bf16.mxu0 %v444
        %620 = vmatpush1.bf16.xpose.msra.mxu0 %v443
        %621 = vmatprep.subr.bf16.mxu0 %v440
        %622 = vmatpush1.bf16.xpose.msra.mxu0 %v439
        %623 = vmatprep.subr.bf16.mxu0 0
        %624 = vmatpush2.bf16.xpose.msra.mxu0 0
        %625 = vmatprep.subr.bf16.mxu0 0
        %626 = vmatpush2.bf16.xpose.msra.mxu0 0
        %627 = vmatprep.subr.bf16.mxu0 0
        %628 = vmatpush2.bf16.xpose.msra.mxu0 0
        %629 = vmatprep.subr.bf16.mxu0 0
        %630 = vmatpush2.bf16.xpose.msra.mxu0 0
        %631 = vmatprep.subr.bf16.mxu0 0
        %632 = vmatpush2.bf16.xpose.msra.mxu0 0
        %633 = vmatprep.subr.bf16.mxu0 0
        %634 = vmatpush2.bf16.xpose.msra.mxu0 0
        %635 = vmatprep.subr.bf16.mxu0 0
        %636 = vmatpush2.bf16.xpose.msra.mxu0 0
        %637 = vmatprep.subr.bf16.mxu0 0
        %638 = vmatpush2.bf16.xpose.msra.mxu0 0
        %639 = vmatprep.mubr.bf16.mxu0 %v562
        %640 = vmatmul.mubr.bf16.gmra.mxu0 %v561
        %v641 = vpop.f32.mrf.mxu0
        %v642 = vadd.f32 %v602, %v641
        %v643 = vpop.f32.mrf.mxu0
        %v644 = vpop.f32.mrf.mxu0
        %v645 = vpop.f32.mrf.mxu0
        %646 = vdwg.mxu0
        %v647 = vadd.f32 %v536, %v642
        %648 = vst.msk [vmem:[%s347] sm:$0x3] %vm534, %v647
        %v649 = vld [vmem:[%s354] sm:$0xff]
        %v650 = vld [vmem:[%s354 + $0x8] sm:$0xff]
        %v651 = vld [vmem:[%s354 + $0x10] sm:$0xff]
        %v652 = vld [vmem:[%s354 + $0x18] sm:$0xff]
        %653 = vmatprep.subr.bf16.mxu0 0
        %654 = vmatpush1.bf16.xpose.msra.mxu0 0
        %655 = vmatprep.subr.bf16.mxu0 0
        %656 = vmatpush1.bf16.xpose.msra.mxu0 0
        %657 = vmatprep.subr.bf16.mxu0 0
        %658 = vmatpush1.bf16.xpose.msra.mxu0 0
        %659 = vmatprep.subr.bf16.mxu0 0
        %660 = vmatpush1.bf16.xpose.msra.mxu0 0
        %661 = vmatprep.subr.bf16.mxu0 0
        %662 = vmatpush1.bf16.xpose.msra.mxu0 0
        %663 = vmatprep.subr.bf16.mxu0 0
        %664 = vmatpush1.bf16.xpose.msra.mxu0 0
        %665 = vmatprep.subr.bf16.mxu0 %v442
        %666 = vmatpush1.bf16.xpose.msra.mxu0 %v441
        %667 = vmatprep.subr.bf16.mxu0 %v438
        %668 = vmatpush1.bf16.xpose.msra.mxu0 %v437
        %669 = vmatprep.subr.bf16.mxu0 0
        %670 = vmatpush2.bf16.xpose.msra.mxu0 0
        %671 = vmatprep.subr.bf16.mxu0 0
        %672 = vmatpush2.bf16.xpose.msra.mxu0 0
        %673 = vmatprep.subr.bf16.mxu0 0
        %674 = vmatpush2.bf16.xpose.msra.mxu0 0
        %675 = vmatprep.subr.bf16.mxu0 0
        %676 = vmatpush2.bf16.xpose.msra.mxu0 0
        %677 = vmatprep.subr.bf16.mxu0 0
        %678 = vmatpush2.bf16.xpose.msra.mxu0 0
        %679 = vmatprep.subr.bf16.mxu0 0
        %680 = vmatpush2.bf16.xpose.msra.mxu0 0
        %681 = vmatprep.subr.bf16.mxu0 0
        %682 = vmatpush2.bf16.xpose.msra.mxu0 0
        %683 = vmatprep.subr.bf16.mxu0 0
        %684 = vmatpush2.bf16.xpose.msra.mxu0 0
        %685 = vmatprep.mubr.bf16.mxu0 %v438
        %686 = vmatmul.mubr.bf16.gmra.mxu0 %v437
        %v687 = vpop.f32.mrf.mxu0
        %v688 = vadd.f32 0.0, %v687
        %v689 = vpop.f32.mrf.mxu0
        %v690 = vpop.f32.mrf.mxu0
        %v691 = vadd.f32 0.0, %v690
        %v692 = vpop.f32.mrf.mxu0
        %693 = vmatprep.mubr.bf16.mxu0 %v442
        %694 = vmatmul.mubr.bf16.gmra.mxu0 %v441
        %v695 = vpop.f32.mrf.mxu0
        %v696 = vadd.f32 0.0, %v695
        %v697 = vpop.f32.mrf.mxu0
        %v698 = vpop.f32.mrf.mxu0
        %v699 = vadd.f32 0.0, %v698
        %v700 = vpop.f32.mrf.mxu0
        %701 = vdwg.mxu0
        %702 = vmatprep.subr.bf16.mxu0 0
        %703 = vmatpush1.bf16.xpose.msra.mxu0 0
        %704 = vmatprep.subr.bf16.mxu0 0
        %705 = vmatpush1.bf16.xpose.msra.mxu0 0
        %706 = vmatprep.subr.bf16.mxu0 0
        %707 = vmatpush1.bf16.xpose.msra.mxu0 0
        %708 = vmatprep.subr.bf16.mxu0 0
        %709 = vmatpush1.bf16.xpose.msra.mxu0 0
        %710 = vmatprep.subr.bf16.mxu0 0
        %711 = vmatpush1.bf16.xpose.msra.mxu0 0
        %712 = vmatprep.subr.bf16.mxu0 0
        %713 = vmatpush1.bf16.xpose.msra.mxu0 0
        %714 = vmatprep.subr.bf16.mxu0 %v444
        %715 = vmatpush1.bf16.xpose.msra.mxu0 %v443
        %716 = vmatprep.subr.bf16.mxu0 %v440
        %717 = vmatpush1.bf16.xpose.msra.mxu0 %v439
        %718 = vmatprep.subr.bf16.mxu0 0
        %719 = vmatpush2.bf16.xpose.msra.mxu0 0
        %720 = vmatprep.subr.bf16.mxu0 0
        %721 = vmatpush2.bf16.xpose.msra.mxu0 0
        %722 = vmatprep.subr.bf16.mxu0 0
        %723 = vmatpush2.bf16.xpose.msra.mxu0 0
        %724 = vmatprep.subr.bf16.mxu0 0
        %725 = vmatpush2.bf16.xpose.msra.mxu0 0
        %726 = vmatprep.subr.bf16.mxu0 0
        %727 = vmatpush2.bf16.xpose.msra.mxu0 0
        %728 = vmatprep.subr.bf16.mxu0 0
        %729 = vmatpush2.bf16.xpose.msra.mxu0 0
        %730 = vmatprep.subr.bf16.mxu0 0
        %731 = vmatpush2.bf16.xpose.msra.mxu0 0
        %732 = vmatprep.subr.bf16.mxu0 0
        %733 = vmatpush2.bf16.xpose.msra.mxu0 0
        %734 = vmatprep.mubr.bf16.mxu0 %v440
        %735 = vmatmul.mubr.bf16.gmra.mxu0 %v439
        %v736 = vpop.f32.mrf.mxu0
        %v737 = vadd.f32 %v688, %v736
        %v738 = vpop.f32.mrf.mxu0
        %v739 = vpop.f32.mrf.mxu0
        %v740 = vadd.f32 %v691, %v739
        %v741 = vpop.f32.mrf.mxu0
        %742 = vmatprep.mubr.bf16.mxu0 %v444
        %743 = vmatmul.mubr.bf16.gmra.mxu0 %v443
        %v744 = vpop.f32.mrf.mxu0
        %v745 = vadd.f32 %v696, %v744
        %v746 = vpop.f32.mrf.mxu0
        %v747 = vpop.f32.mrf.mxu0
        %v748 = vadd.f32 %v699, %v747
        %v749 = vpop.f32.mrf.mxu0
        %750 = vdwg.mxu0
        %v751 = vadd.f32 %v649, %v737
        %v752 = vadd.f32 %v650, %v740
        %v753 = vadd.f32 %v651, %v745
        %v754 = vadd.f32 %v652, %v748
        %vm755 = vcmask 261120
        %756 = vst.msk [vmem:[%s354] sm:$0xff] %vm755, %v751
        %757 = vst.msk [vmem:[%s354 + $0x8] sm:$0xff] %vm755, %v752
        %758 = vst.msk [vmem:[%s354 + $0x10] sm:$0xff] %vm755, %v753
        %759 = vst.msk [vmem:[%s354 + $0x18] sm:$0xff] %vm755, %v754
        %s760 = sand.u32 %s133, 1
        %s761 = scalar_lea.sflag [#allocation4], %s760
        %s762 = sand.u32 %s133, 1
        %s763 = smul.addr %s762, 2
        %s764 = scalar_lea.vmem [#allocation8], %s763
        %s765 = sand.u32 %s29, 1
        %s766 = scalar_lea.sflag [#allocation10], %s765
        %s767 = sand.u32 %s159, 1
        %s768 = smul.addr %s767, 2
        %s769 = scalar_lea.vmem [#allocation9], %s768
        %s770 = sand.u32 %s29, 1
        %s771 = scalar_lea.sflag [#allocation10], %s770
        %s772 = sand.u32 %s185, 1
        %s773 = smul.addr %s772, 32
        %s774 = scalar_lea.vmem [#allocation11], %s773
        // Predicated region
        $region49: #{tpu_custom_call.1} parent=31 // pred_check
          %p775 = pneg %p143
        $region50: #{tpu_custom_call.1} parent=31 // pred_check_branch
          %777 = sbr.rel (%p775) target = $region52
        $region51: #{tpu_custom_call.1} parent=31 // pred_region
          %s779 = ssub.s32 32, 32
          %780 = vsyncadd %s761, %s779
          %s781 = smul.addr %s33, 32
          %s782 = scalar_lea.hbm %s3, %s781
          %s784 = sshll.u32 %s764, 4
          %s785 = int_to_ptr.vmem [resolvable:$true] %s784
          %787 = dma.vmem_to_hbm [thread:$0]  %s785, 32, %s782, %s761
        $region52: #{tpu_custom_call.1} parent=31 // pred_fallthru
          _
        // Predicated region
        $region53: #{tpu_custom_call.1} parent=31 // pred_check
          %p788 = pneg %p169
        $region54: #{tpu_custom_call.1} parent=31 // pred_check_branch
          %790 = sbr.rel (%p788) target = $region56
        $region55: #{tpu_custom_call.1} parent=31 // pred_region
          %s792 = ssub.s32 32, 32
          %793 = vsyncadd %s766, %s792
          %s794 = smul.addr %s33, 32
          %s795 = scalar_lea.hbm %s4, %s794
          %s797 = sshll.u32 %s769, 4
          %s798 = int_to_ptr.vmem [resolvable:$true] %s797
          %800 = dma.vmem_to_hbm [thread:$0]  %s798, 32, %s795, %s766
        $region56: #{tpu_custom_call.1} parent=31 // pred_fallthru
          _
        // Predicated region
        $region57: #{tpu_custom_call.1} parent=31 // pred_check
          %p801 = pneg %p195
        $region58: #{tpu_custom_call.1} parent=31 // pred_check_branch
          %803 = sbr.rel (%p801) target = $region60
        $region59: #{tpu_custom_call.1} parent=31 // pred_region
          %s805 = ssub.s32 512, 512
          %806 = vsyncadd %s771, %s805
          %s807 = smul.addr %s33, 4
          %s808 = smul.addr %s807, 128
          %s809 = scalar_lea.hbm %s5, %s808
          %s810 = sshll.u32 %s774, 4
          %s811 = int_to_ptr.vmem [resolvable:$true] %s810
          %816 = dma.vmem_to_hbm [thread:$0]  %s811, 512, %s809, %s771, 128, 128, 8
        $region60: #{tpu_custom_call.1} parent=31 // pred_fallthru
          _
      $region32: #{tpu_custom_call.1} parent=5 // pred_fallthru
        _
      %p817 = scmp.le.s32.totalorder 2, %s24
      // Predicated region
      $region61: #{tpu_custom_call.1} parent=5 // pred_check
        %p818 = pneg %p817
      $region62: #{tpu_custom_call.1} parent=5 // pred_check_branch
        %820 = sbr.rel (%p818) target = $region64
      $region63: #{tpu_custom_call.1} parent=5 // pred_region
        %s821 = ssub.s32 %s24, 2
        // Predicated region
        $region65: #{tpu_custom_call.1} parent=63 // pred_check
          %p822 = pneg %p149
        $region66: #{tpu_custom_call.1} parent=63 // pred_check_branch
          %824 = sbr.rel (%p822) target = $region68
        $region67: #{tpu_custom_call.1} parent=63 // pred_region
          %s825 = sand.u32 %s134, 1
          %s826 = scalar_lea.sflag [#allocation4], %s825
          %s827 = sand.u32 %s134, 1
          %s828 = smul.addr %s827, 2
          %s829 = scalar_lea.vmem [#allocation8], %s828
          %830 = dma.done %s826, 32
        $region68: #{tpu_custom_call.1} parent=63 // pred_fallthru
          _
        // Predicated region
        $region69: #{tpu_custom_call.1} parent=63 // pred_check
          %p831 = pneg %p175
        $region70: #{tpu_custom_call.1} parent=63 // pred_check_branch
          %833 = sbr.rel (%p831) target = $region72
        $region71: #{tpu_custom_call.1} parent=63 // pred_region
          %s834 = sand.u32 %s30, 1
          %s835 = scalar_lea.sflag [#allocation10], %s834
          %s836 = sand.u32 %s160, 1
          %s837 = smul.addr %s836, 2
          %s838 = scalar_lea.vmem [#allocation9], %s837
          %839 = dma.done %s835, 32
        $region72: #{tpu_custom_call.1} parent=63 // pred_fallthru
          _
        // Predicated region
        $region73: #{tpu_custom_call.1} parent=63 // pred_check
          %p840 = pneg %p201
        $region74: #{tpu_custom_call.1} parent=63 // pred_check_branch
          %842 = sbr.rel (%p840) target = $region76
        $region75: #{tpu_custom_call.1} parent=63 // pred_region
          %s843 = sand.u32 %s30, 1
          %s844 = scalar_lea.sflag [#allocation10], %s843
          %s845 = sand.u32 %s186, 1
          %s846 = smul.addr %s845, 32
          %s847 = scalar_lea.vmem [#allocation11], %s846
          %848 = dma.done %s844, 512
        $region76: #{tpu_custom_call.1} parent=63 // pred_fallthru
          _
      $region64: #{tpu_custom_call.1} parent=5 // pred_fallthru
        _
    $region6: #{tpu_custom_call.1} parent=1 // loop_footer
      %s28 = sadd.s32 1, %s24
    $region7: #{tpu_custom_call.1} parent=1 // loop_footer_branch
      %23 = sbr.rel target = $region3
    $region8: #{tpu_custom_call.1} parent=1 // loop_exit
      _
    %849 = vsyncpa [#allocation3], 1
    %s850 = scalar_lea.sflag [#allocation3], 1
    %851 = vsyncpa %s850, 1
    %852 = vsyncpa [#allocation6], 1
    %s853 = scalar_lea.sflag [#allocation6], 1
    %854 = vsyncpa %s853, 1
    %855 = vsyncpa [#allocation4], 1
    %s856 = scalar_lea.sflag [#allocation4], 1
    %857 = vsyncpa %s856, 1
    %858 = vsyncpa [#allocation10], 1
    %s859 = scalar_lea.sflag [#allocation10], 1
    %860 = vsyncpa %s859, 1

</llo_original>
